<compile_context>
chip_gen: v7x
topology: tpu7x:2x2x1
jax: 0.10.0
libtpu: 0.0.40
codegen_flags: <defaults>
</compile_context>

<pallas_src>
import jax
import jax.numpy as jnp
from jax.experimental import pallas as pl
from jax.experimental.pallas import tpu as pltpu

_NEG_INF = float("-inf")   # Python float -> jaxpr literal, not a captured array
_BIG = 2 ** 30             # Python int   -> jaxpr literal, not a captured array


def _make_nn_kernel(with_sim, tn, tm, n_valid, m_valid, n_pad, m_pad):
    mask_cols = m_pad != m_valid      # padded columns exist (last M tile only)
    mask_rows = n_pad != n_valid      # padded rows exist (last N tile only)

    def kernel(d0_ref, d1t_ref, *refs):
        if with_sim:
            sim_ref, m0_ref, m1_ref, rmax_ref, cmax_ref, carg_ref = refs
        else:
            m0_ref, m1_ref, rmax_ref, cmax_ref, carg_ref = refs

        i = pl.program_id(1)              # N-tile index
        j = pl.program_id(2)              # M-tile index (innermost)

        # (TN, D) @ (D, TM) on the MXU, f32 accumulation (inputs are bf16).
        sim = jnp.dot(d0_ref[0], d1t_ref[0], preferred_element_type=jnp.float32)
        if with_sim:
            sim_ref[0] = sim.astype(sim_ref.dtype)

        # Local (per-tile) iotas; global offsets are added as scalars after
        # the reductions (no full-tile global-id tensors).
        local_col = jax.lax.broadcasted_iota(jnp.int32, (tn, tm), 1)
        local_row = jax.lax.broadcasted_iota(jnp.int32, (tn, tm), 0)

        # Padded rows/cols must never win an argmax.  Masks are only emitted
        # when padding exists at all (trace-time Python bools) and use scalar
        # thresholds against the local iota.
        sim_r = (jnp.where(local_col < m_valid - j * tm, sim, _NEG_INF)
                 if mask_cols else sim)
        sim_c = (jnp.where(local_row < n_valid - i * tn, sim, _NEG_INF)
                 if mask_rows else sim)

        # ---- matches0: running argmax over M per row, carried across j ------
        # Running argmax lives directly in the resident (TN,1) m0 output block;
        # only the running max needs scratch.
        @pl.when(j == 0)
        def _():
            rmax_ref[...] = jnp.full((tn, 1), _NEG_INF, jnp.float32)
            m0_ref[0] = jnp.zeros((tn, 1), jnp.int32)

        t_rmax = jnp.max(sim_r, axis=1, keepdims=True)                       # (TN,1)
        t_rarg = (jnp.min(jnp.where(sim_r == t_rmax, local_col, _BIG),
                          axis=1, keepdims=True) + j * tm)                   # (TN,1)
        r_upd = t_rmax > rmax_ref[...]        # strict '>' keeps first occurrence
        rmax_ref[...] = jnp.where(r_upd, t_rmax, rmax_ref[...])
        m0_ref[0] = jnp.where(r_upd, t_rarg, m0_ref[0])

        # ---- matches1: running argmax over N per column, carried across i ---
        @pl.when(i == 0)
        def _():
            cmax_ref[j] = jnp.full((1, tm), _NEG_INF, jnp.float32)
            carg_ref[j] = jnp.zeros((1, tm), jnp.int32)

        t_cmax = jnp.max(sim_c, axis=0, keepdims=True)                       # (1,TM)
        t_carg = (jnp.min(jnp.where(sim_c == t_cmax, local_row, _BIG),
                          axis=0, keepdims=True) + i * tn)                   # (1,TM)
        c_upd = t_cmax > cmax_ref[j]
        new_cmax = jnp.where(c_upd, t_cmax, cmax_ref[j])
        new_carg = jnp.where(c_upd, t_carg, carg_ref[j])
        cmax_ref[j] = new_cmax
        carg_ref[j] = new_carg
        # m1 block (bi,0,j) is revisited once per i (sequential grid); the
        # last visit (i == nt-1) writes back the final value.  Relies on the
        # i axis staying "arbitrary" -- do NOT mark it parallel.
        m1_ref[0] = new_carg

    return kernel


def _pick_tile(size, tile):
    """Full-extent block for small inputs; otherwise a 128-aligned tile + padding."""
    if size <= tile:
        return size, size
    if tile % 128 != 0:
        raise ValueError("tile sizes must be multiples of 128 when tiling is needed")
    return tile, pl.cdiv(size, tile) * tile


def nearest_neighbor_matcher(descriptors0, descriptors1, *,
                             tile_n=1024, tile_m=1024,
                             mxu_dtype=jnp.bfloat16,
                             sim_dtype=jnp.float32,
                             return_similarity=True):
    """Forward pass of NearestNeighborMatcher (default config).

    Perf notes:
      * sim_dtype=jnp.bfloat16 roughly halves the dominant HBM stream (the
        similarity writeback); matches are unaffected (argmax runs on the
        in-kernel f32 accumulator).  f32 default keeps torch output dtype.
      * return_similarity=False skips the sim writeback entirely.
      * With mxu_dtype=bf16, near-tie argmax results may differ from a pure
        f32 torch reference; inputs are assumed tie-free.
    """
    b, n, dim = descriptors0.shape
    b1, m, dim1 = descriptors1.shape
    assert b == b1 and dim == dim1

    tn, n_pad = _pick_tile(n, tile_n)
    tm, m_pad = _pick_tile(m, tile_m)
    nt, mt = n_pad // tn, m_pad // tm

    d0 = descriptors0
    d1 = descriptors1
    if n_pad != n:
        d0 = jnp.pad(d0, ((0, 0), (0, n_pad - n), (0, 0)))
    if m_pad != m:
        d1 = jnp.pad(d1, ((0, 0), (0, m_pad - m), (0, 0)))
    d0 = d0.astype(mxu_dtype)
    d1t = jnp.transpose(d1, (0, 2, 1)).astype(mxu_dtype)        # (B, D, M_pad)

    out_shapes, out_specs = [], []
    if return_similarity:
        out_shapes.append(jax.ShapeDtypeStruct((b, n_pad, m_pad), sim_dtype))
        out_specs.append(pl.BlockSpec((1, tn, tm), lambda bi, i, j: (bi, i, j)))
    out_shapes += [jax.ShapeDtypeStruct((b, n_pad, 1), jnp.int32),
                   jax.ShapeDtypeStruct((b, 1, m_pad), jnp.int32)]
    out_specs += [pl.BlockSpec((1, tn, 1), lambda bi, i, j: (bi, i, 0)),
                  pl.BlockSpec((1, 1, tm), lambda bi, i, j: (bi, 0, j))]

    # VMEM budget: double-buffered inputs + (optional) sim block + match
    # blocks + argmax scratch + in-kernel f32 temporaries.  Clamp to the
    # device's physical VMEM (v7x: 64 MiB) minus headroom.
    in_item = jnp.dtype(mxu_dtype).itemsize
    sim_item = jnp.dtype(sim_dtype).itemsize
    vmem_est = (2 * (tn * dim + dim * tm) * in_item
                + (2 * tn * tm * sim_item if return_similarity else 0)
                + 2 * (tn * 128 + 8 * tm) * 4     # m0/m1 out blocks (lane/sublane padded)
                + tn * 128 * 4                    # running row-max scratch
                + 2 * mt * 8 * tm * 4             # running col max/argmax scratch
                + 2 * tn * tm * 4)                # f32 sim temporaries
    try:
        phys_vmem = int(pltpu.get_tpu_info().vmem_capacity_bytes)
    except Exception:
        phys_vmem = 64 * 1024 * 1024              # conservative (v7x per-TC)
    vmem_cap = max(phys_vmem - 8 * 1024 * 1024, 16 * 1024 * 1024)
    vmem_limit = int(min(max(2 * vmem_est, 32 * 1024 * 1024), vmem_cap))

    kernel = _make_nn_kernel(return_similarity, tn, tm, n, m, n_pad, m_pad)

    outs = pl.pallas_call(
        kernel,
        out_shape=tuple(out_shapes),
        grid=(b, nt, mt),
        in_specs=[pl.BlockSpec((1, tn, dim), lambda bi, i, j: (bi, i, 0)),
                  pl.BlockSpec((1, dim, tm), lambda bi, i, j: (bi, 0, j))],
        out_specs=tuple(out_specs),
        scratch_shapes=[pltpu.VMEM((tn, 1), jnp.float32),      # running row max
                        pltpu.VMEM((mt, 1, tm), jnp.float32),  # running col max / M tile
                        pltpu.VMEM((mt, 1, tm), jnp.int32)],   # running col argmax / M tile
        compiler_params=pltpu.CompilerParams(
            dimension_semantics=("parallel", "arbitrary", "arbitrary"),
            vmem_limit_bytes=vmem_limit),
    )(d0, d1t)

    if return_similarity:
        sim_p, m0_p, m1_p = outs
        similarity = sim_p[:, :n, :m]
    else:
        m0_p, m1_p = outs
        similarity = None

    matches0 = m0_p[:, :n, 0]        # (B, N) int32
    matches1 = m1_p[:, 0, :m]        # (B, M) int32

    # TODO(synk): ratio_thresh / distance_thresh need a per-row top-2; the
    # default config disables both so only plain argmax is implemented.

    # mutual check (data-dependent gather glue, plain JAX)
    inds0 = jnp.arange(n, dtype=jnp.int32)[None, :]
    inds1 = jnp.arange(m, dtype=jnp.int32)[None, :]
    loop0 = jnp.take_along_axis(matches1, jnp.where(matches0 > -1, matches0, 0), axis=-1)
    loop1 = jnp.take_along_axis(matches0, jnp.where(matches1 > -1, matches1, 0), axis=-1)
    matches0 = jnp.where((matches0 > -1) & (inds0 == loop0), matches0, -1)
    matches1 = jnp.where((matches1 > -1) & (inds1 == loop1), matches1, -1)

    # Per the torch module, matching_scores are binary (matches > -1).float().
    return {
        "matches0": matches0,
        "matches1": matches1,
        "matching_scores0": (matches0 > -1).astype(jnp.float32),
        "matching_scores1": (matches1 > -1).astype(jnp.float32),
        "similarity": similarity,
    }


def _check(out, d0, d1, mxu_dtype, atol):
    """Numerics vs. bf16 einsum; argmax/mutual-check logic vs. plain-JAX on the
    kernel's own f32 similarity (avoids near-tie flakiness across backends)."""
    n, m = d0.shape[1], d1.shape[1]
    sim_ref = jnp.einsum("bnd,bmd->bnm", d0.astype(mxu_dtype), d1.astype(mxu_dtype),
                         preferred_element_type=jnp.float32)
    assert out["similarity"].shape == sim_ref.shape
    assert jnp.allclose(out["similarity"], sim_ref, atol=atol), "similarity mismatch"

    sim = out["similarity"]
    m0 = jnp.argmax(sim, axis=-1).astype(jnp.int32)
    m1 = jnp.argmax(sim, axis=-2).astype(jnp.int32)
    inds0 = jnp.arange(n, dtype=jnp.int32)[None, :]
    inds1 = jnp.arange(m, dtype=jnp.int32)[None, :]
    loop0 = jnp.take_along_axis(m1, m0, axis=-1)
    loop1 = jnp.take_along_axis(m0, m1, axis=-1)
    m0 = jnp.where(inds0 == loop0, m0, -1)
    m1 = jnp.where(inds1 == loop1, m1, -1)
    assert (out["matches0"] == m0).all(), "matches0 mismatch"
    assert (out["matches1"] == m1).all(), "matches1 mismatch"
    assert jnp.array_equal(out["matching_scores0"], (m0 > -1).astype(jnp.float32))
    assert jnp.array_equal(out["matching_scores1"], (m1 > -1).astype(jnp.float32))


if __name__ == "__main__":
    key = jax.random.PRNGKey(0)
    k0, k1, k2, k3 = jax.random.split(key, 4)

    # Test 1: small shapes, single-tile path.
    B, N, M, D = 2, 16, 24, 32
    d0 = jax.random.normal(k0, (B, N, D), jnp.float32)
    d1 = jax.random.normal(k1, (B, M, D), jnp.float32)
    d0 = d0 / jnp.linalg.norm(d0, axis=-1, keepdims=True)
    d1 = d1 / jnp.linalg.norm(d1, axis=-1, keepdims=True)
    out = nearest_neighbor_matcher(d0, d1)
    jax.block_until_ready(out)
    _check(out, d0, d1, jnp.bfloat16, atol=2e-4)

    # Test 2: exercises N/M tiling, padding masks and the online argmax merge.
    B2, N2, M2, D2 = 2, 200, 300, 64
    e0 = jax.random.normal(k2, (B2, N2, D2), jnp.float32)
    e1 = jax.random.normal(k3, (B2, M2, D2), jnp.float32)
    e0 = e0 / jnp.linalg.norm(e0, axis=-1, keepdims=True)
    e1 = e1 / jnp.linalg.norm(e1, axis=-1, keepdims=True)
    out2 = nearest_neighbor_matcher(e0, e1, tile_n=128, tile_m=128)
    jax.block_until_ready(out2)
    _check(out2, e0, e1, jnp.bfloat16, atol=2e-4)

    # Test 3: matches-only path (no similarity writeback) must give identical matches.
    out3 = nearest_neighbor_matcher(e0, e1, tile_n=128, tile_m=128,
                                    return_similarity=False)
    jax.block_until_ready(out3)
    assert out3["similarity"] is None
    assert (out3["matches0"] == out2["matches0"]).all()
    assert (out3["matches1"] == out2["matches1"]).all()

    # Test 4: bf16 similarity writeback (perf-recommended); matches unchanged.
    out4 = nearest_neighbor_matcher(e0, e1, tile_n=128, tile_m=128,
                                    sim_dtype=jnp.bfloat16)
    jax.block_until_ready(out4)
    assert (out4["matches0"] == out2["matches0"]).all()
    assert (out4["matches1"] == out2["matches1"]).all()
    assert jnp.allclose(out4["similarity"].astype(jnp.float32),
                        out2["similarity"], atol=1e-2)

    print("KERNEL_OK")
</pallas_src>

<mosaic_0001>
module attributes {stable_mosaic.version = 11 : i64} {
  func.func @kernel(%arg0: i32, %arg1: i32, %arg2: i32, %arg3: memref<1x16x32xbf16, #tpu.memory_space<vmem>>, %arg4: memref<1x32x24xbf16, #tpu.memory_space<vmem>>, %arg5: memref<1x16x24xf32, #tpu.memory_space<vmem>>, %arg6: memref<1x16x1xi32, #tpu.memory_space<vmem>>, %arg7: memref<1x1x24xi32, #tpu.memory_space<vmem>>, %arg8: memref<16x1xf32, #tpu.memory_space<vmem>>, %arg9: memref<1x1x24xf32, #tpu.memory_space<vmem>>, %arg10: memref<1x1x24xi32, #tpu.memory_space<vmem>>) attributes {dimension_semantics = [#tpu.dimension_semantics<parallel>, #tpu.dimension_semantics<arbitrary>, #tpu.dimension_semantics<arbitrary>], iteration_bounds = array<i64: 2, 1, 1>, scalar_prefetch = 0 : i64, scratch_operands = 3 : i64, tpu.core_type = #tpu.core_type<tc>, window_params = [{transform_indices = @transform_0, window_bounds = array<i64: 1, 16, 32>}, {transform_indices = @transform_1, window_bounds = array<i64: 1, 32, 24>}, {transform_indices = @transform_2, window_bounds = array<i64: 1, 16, 24>}, {transform_indices = @transform_3, window_bounds = array<i64: 1, 16, 1>}, {transform_indices = @transform_4, window_bounds = array<i64: 1, 1, 24>}]} {
    %c0 = arith.constant 0 : index
    %c0_0 = arith.constant 0 : index
    %c0_1 = arith.constant 0 : index
    %0 = vector.load %arg3[%c0, %c0_0, %c0_1] : memref<1x16x32xbf16, #tpu.memory_space<vmem>>, vector<1x16x32xbf16>
    %1 = vector.shape_cast %0 : vector<1x16x32xbf16> to vector<16x32xbf16>
    %c0_2 = arith.constant 0 : index
    %c0_3 = arith.constant 0 : index
    %c0_4 = arith.constant 0 : index
    %2 = vector.load %arg4[%c0_2, %c0_3, %c0_4] : memref<1x32x24xbf16, #tpu.memory_space<vmem>>, vector<1x32x24xbf16>
    %3 = vector.shape_cast %2 : vector<1x32x24xbf16> to vector<32x24xbf16>
    %cst = arith.constant dense<0.000000e+00> : vector<16x24xf32>
    %4 = tpu.matmul %1, %3, %cst {dimension_numbers = #tpu.dot_dimension_numbers<[1], [0], [0], [1], [0, 0, 1, 1], [], []>} : vector<16x32xbf16>, vector<32x24xbf16>, vector<16x24xf32> -> vector<16x24xf32>
    %c0_5 = arith.constant 0 : index
    %c0_6 = arith.constant 0 : index
    %c0_7 = arith.constant 0 : index
    %5 = vector.load %arg5[%c0_5, %c0_6, %c0_7] : memref<1x16x24xf32, #tpu.memory_space<vmem>>, vector<1x16x24xf32>
    %6 = vector.shape_cast %5 : vector<1x16x24xf32> to vector<16x24xf32>
    %7 = vector.shape_cast %4 : vector<16x24xf32> to vector<1x16x24xf32>
    tpu.vector_store %arg5[%c0_5, %c0_6, %c0_7], %7 {strides = array<i32>} : memref<1x16x24xf32, #tpu.memory_space<vmem>>, vector<1x16x24xf32>,
    %8 = tpu.iota {dimensions = array<i32: 1>} : vector<16x24xi32>
    %9 = tpu.iota {dimensions = array<i32: 0>} : vector<16x24xi32>
    %c0_i32 = arith.constant 0 : i32
    %10 = arith.cmpi eq, %arg2, %c0_i32 : i32
    %11 = arith.extui %10 : i1 to i32
    %c0_i32_8 = arith.constant 0 : i32
    %12 = arith.cmpi ne, %11, %c0_i32_8 : i32
    scf.if %12 {
      %cst_41 = arith.constant 0xFF800000 : f32
      %72 = vector.broadcast %cst_41 : f32 to vector<16x1xf32>
      %c0_42 = arith.constant 0 : index
      %c0_43 = arith.constant 0 : index
      %73 = vector.load %arg8[%c0_42, %c0_43] : memref<16x1xf32, #tpu.memory_space<vmem>>, vector<16x1xf32>
      tpu.vector_store %arg8[%c0_42, %c0_43], %72 {strides = array<i32>} : memref<16x1xf32, #tpu.memory_space<vmem>>, vector<16x1xf32>,
      %c0_i32_44 = arith.constant 0 : i32
      %74 = vector.broadcast %c0_i32_44 : i32 to vector<16x1xi32>
      %c0_45 = arith.constant 0 : index
      %c0_46 = arith.constant 0 : index
      %c0_47 = arith.constant 0 : index
      %75 = vector.load %arg6[%c0_45, %c0_46, %c0_47] : memref<1x16x1xi32, #tpu.memory_space<vmem>>, vector<1x16x1xi32>
      %76 = vector.shape_cast %75 : vector<1x16x1xi32> to vector<16x1xi32>
      %77 = vector.shape_cast %74 : vector<16x1xi32> to vector<1x16x1xi32>
      tpu.vector_store %arg6[%c0_45, %c0_46, %c0_47], %77 {strides = array<i32>} : memref<1x16x1xi32, #tpu.memory_space<vmem>>, vector<1x16x1xi32>,
    } else {
    }
    %cst_9 = arith.constant dense<0xFF800000> : vector<16xf32>
    %13 = vector.multi_reduction <maximumf>, %4, %cst_9 [1] : vector<16x24xf32> to vector<16xf32>
    %14 = vector.shape_cast %13 : vector<16xf32> to vector<16x1xf32>
    %15 = vector.broadcast %14 : vector<16x1xf32> to vector<16x24xf32>
    %16 = arith.cmpf oeq, %4, %15 : vector<16x24xf32>
    %c1073741824_i32 = arith.constant 1073741824 : i32
    %17 = vector.broadcast %c1073741824_i32 : i32 to vector<16x24xi32>
    %18 = arith.select %16, %8, %17 : vector<16x24xi1>, vector<16x24xi32>
    %cst_10 = arith.constant dense<2147483647> : vector<16xi32>
    %19 = vector.multi_reduction <minsi>, %18, %cst_10 [1] : vector<16x24xi32> to vector<16xi32>
    %20 = vector.shape_cast %19 : vector<16xi32> to vector<16x1xi32>
    %c24_i32 = arith.constant 24 : i32
    %21 = arith.muli %arg2, %c24_i32 : i32
    %22 = vector.broadcast %21 : i32 to vector<16x1xi32>
    %23 = arith.addi %20, %22 : vector<16x1xi32>
    %c0_11 = arith.constant 0 : index
    %c0_12 = arith.constant 0 : index
    %24 = vector.load %arg8[%c0_11, %c0_12] : memref<16x1xf32, #tpu.memory_space<vmem>>, vector<16x1xf32>
    %25 = arith.cmpf ogt, %14, %24 : vector<16x1xf32>
    %c0_13 = arith.constant 0 : index
    %c0_14 = arith.constant 0 : index
    %26 = vector.load %arg8[%c0_13, %c0_14] : memref<16x1xf32, #tpu.memory_space<vmem>>, vector<16x1xf32>
    %27 = arith.select %25, %14, %26 : vector<16x1xi1>, vector<16x1xf32>
    %c0_15 = arith.constant 0 : index
    %c0_16 = arith.constant 0 : index
    %28 = vector.load %arg8[%c0_15, %c0_16] : memref<16x1xf32, #tpu.memory_space<vmem>>, vector<16x1xf32>
    tpu.vector_store %arg8[%c0_15, %c0_16], %27 {strides = array<i32>} : memref<16x1xf32, #tpu.memory_space<vmem>>, vector<16x1xf32>,
    %c0_17 = arith.constant 0 : index
    %c0_18 = arith.constant 0 : index
    %c0_19 = arith.constant 0 : index
    %29 = vector.load %arg6[%c0_17, %c0_18, %c0_19] : memref<1x16x1xi32, #tpu.memory_space<vmem>>, vector<1x16x1xi32>
    %30 = vector.shape_cast %29 : vector<1x16x1xi32> to vector<16x1xi32>
    %31 = arith.select %25, %23, %30 : vector<16x1xi1>, vector<16x1xi32>
    %c0_20 = arith.constant 0 : index
    %c0_21 = arith.constant 0 : index
    %c0_22 = arith.constant 0 : index
    %32 = vector.load %arg6[%c0_20, %c0_21, %c0_22] : memref<1x16x1xi32, #tpu.memory_space<vmem>>, vector<1x16x1xi32>
    %33 = vector.shape_cast %32 : vector<1x16x1xi32> to vector<16x1xi32>
    %34 = vector.shape_cast %31 : vector<16x1xi32> to vector<1x16x1xi32>
    tpu.vector_store %arg6[%c0_20, %c0_21, %c0_22], %34 {strides = array<i32>} : memref<1x16x1xi32, #tpu.memory_space<vmem>>, vector<1x16x1xi32>,
    %c0_i32_23 = arith.constant 0 : i32
    %35 = arith.cmpi eq, %arg1, %c0_i32_23 : i32
    %36 = arith.extui %35 : i1 to i32
    %c0_i32_24 = arith.constant 0 : i32
    %37 = arith.cmpi ne, %36, %c0_i32_24 : i32
    scf.if %37 {
      %cst_41 = arith.constant 0xFF800000 : f32
      %72 = vector.broadcast %cst_41 : f32 to vector<1x24xf32>
      %73 = arith.index_cast %arg2 : i32 to index
      %c0_42 = arith.constant 0 : index
      %c0_43 = arith.constant 0 : index
      %74 = vector.load %arg9[%73, %c0_42, %c0_43] : memref<1x1x24xf32, #tpu.memory_space<vmem>>, vector<1x1x24xf32>
      %75 = vector.shape_cast %74 : vector<1x1x24xf32> to vector<1x24xf32>
      %76 = vector.shape_cast %72 : vector<1x24xf32> to vector<1x1x24xf32>
      tpu.vector_store %arg9[%73, %c0_42, %c0_43], %76 {strides = array<i32>} : memref<1x1x24xf32, #tpu.memory_space<vmem>>, vector<1x1x24xf32>,
      %c0_i32_44 = arith.constant 0 : i32
      %77 = vector.broadcast %c0_i32_44 : i32 to vector<1x24xi32>
      %78 = arith.index_cast %arg2 : i32 to index
      %c0_45 = arith.constant 0 : index
      %c0_46 = arith.constant 0 : index
      %79 = vector.load %arg10[%78, %c0_45, %c0_46] : memref<1x1x24xi32, #tpu.memory_space<vmem>>, vector<1x1x24xi32>
      %80 = vector.shape_cast %79 : vector<1x1x24xi32> to vector<1x24xi32>
      %81 = vector.shape_cast %77 : vector<1x24xi32> to vector<1x1x24xi32>
      tpu.vector_store %arg10[%78, %c0_45, %c0_46], %81 {strides = array<i32>} : memref<1x1x24xi32, #tpu.memory_space<vmem>>, vector<1x1x24xi32>,
    } else {
    }
    %cst_25 = arith.constant dense<0xFF800000> : vector<24xf32>
    %38 = vector.multi_reduction <maximumf>, %4, %cst_25 [0] : vector<16x24xf32> to vector<24xf32>
    %39 = vector.shape_cast %38 : vector<24xf32> to vector<1x24xf32>
    %40 = vector.broadcast %39 : vector<1x24xf32> to vector<16x24xf32>
    %41 = arith.cmpf oeq, %4, %40 : vector<16x24xf32>
    %c1073741824_i32_26 = arith.constant 1073741824 : i32
    %42 = vector.broadcast %c1073741824_i32_26 : i32 to vector<16x24xi32>
    %43 = arith.select %41, %9, %42 : vector<16x24xi1>, vector<16x24xi32>
    %cst_27 = arith.constant dense<2147483647> : vector<24xi32>
    %44 = vector.multi_reduction <minsi>, %43, %cst_27 [0] : vector<16x24xi32> to vector<24xi32>
    %45 = vector.shape_cast %44 : vector<24xi32> to vector<1x24xi32>
    %c16_i32 = arith.constant 16 : i32
    %46 = arith.muli %arg1, %c16_i32 : i32
    %47 = vector.broadcast %46 : i32 to vector<1x24xi32>
    %48 = arith.addi %45, %47 : vector<1x24xi32>
    %49 = arith.index_cast %arg2 : i32 to index
    %c0_28 = arith.constant 0 : index
    %c0_29 = arith.constant 0 : index
    %50 = vector.load %arg9[%49, %c0_28, %c0_29] : memref<1x1x24xf32, #tpu.memory_space<vmem>>, vector<1x1x24xf32>
    %51 = vector.shape_cast %50 : vector<1x1x24xf32> to vector<1x24xf32>
    %52 = arith.cmpf ogt, %39, %51 : vector<1x24xf32>
    %53 = arith.index_cast %arg2 : i32 to index
    %c0_30 = arith.constant 0 : index
    %c0_31 = arith.constant 0 : index
    %54 = vector.load %arg9[%53, %c0_30, %c0_31] : memref<1x1x24xf32, #tpu.memory_space<vmem>>, vector<1x1x24xf32>
    %55 = vector.shape_cast %54 : vector<1x1x24xf32> to vector<1x24xf32>
    %56 = arith.select %52, %39, %55 : vector<1x24xi1>, vector<1x24xf32>
    %57 = arith.index_cast %arg2 : i32 to index
    %c0_32 = arith.constant 0 : index
    %c0_33 = arith.constant 0 : index
    %58 = vector.load %arg10[%57, %c0_32, %c0_33] : memref<1x1x24xi32, #tpu.memory_space<vmem>>, vector<1x1x24xi32>
    %59 = vector.shape_cast %58 : vector<1x1x24xi32> to vector<1x24xi32>
    %60 = arith.select %52, %48, %59 : vector<1x24xi1>, vector<1x24xi32>
    %61 = arith.index_cast %arg2 : i32 to index
    %c0_34 = arith.constant 0 : index
    %c0_35 = arith.constant 0 : index
    %62 = vector.load %arg9[%61, %c0_34, %c0_35] : memref<1x1x24xf32, #tpu.memory_space<vmem>>, vector<1x1x24xf32>
    %63 = vector.shape_cast %62 : vector<1x1x24xf32> to vector<1x24xf32>
    %64 = vector.shape_cast %56 : vector<1x24xf32> to vector<1x1x24xf32>
    tpu.vector_store %arg9[%61, %c0_34, %c0_35], %64 {strides = array<i32>} : memref<1x1x24xf32, #tpu.memory_space<vmem>>, vector<1x1x24xf32>,
    %65 = arith.index_cast %arg2 : i32 to index
    %c0_36 = arith.constant 0 : index
    %c0_37 = arith.constant 0 : index
    %66 = vector.load %arg10[%65, %c0_36, %c0_37] : memref<1x1x24xi32, #tpu.memory_space<vmem>>, vector<1x1x24xi32>
    %67 = vector.shape_cast %66 : vector<1x1x24xi32> to vector<1x24xi32>
    %68 = vector.shape_cast %60 : vector<1x24xi32> to vector<1x1x24xi32>
    tpu.vector_store %arg10[%65, %c0_36, %c0_37], %68 {strides = array<i32>} : memref<1x1x24xi32, #tpu.memory_space<vmem>>, vector<1x1x24xi32>,
    %c0_38 = arith.constant 0 : index
    %c0_39 = arith.constant 0 : index
    %c0_40 = arith.constant 0 : index
    %69 = vector.load %arg7[%c0_38, %c0_39, %c0_40] : memref<1x1x24xi32, #tpu.memory_space<vmem>>, vector<1x1x24xi32>
    %70 = vector.shape_cast %69 : vector<1x1x24xi32> to vector<1x24xi32>
    %71 = vector.shape_cast %60 : vector<1x24xi32> to vector<1x1x24xi32>
    tpu.vector_store %arg7[%c0_38, %c0_39, %c0_40], %71 {strides = array<i32>} : memref<1x1x24xi32, #tpu.memory_space<vmem>>, vector<1x1x24xi32>,
    return
  }
  func.func @transform_0(%arg0: i32, %arg1: i32, %arg2: i32) -> (i32, i32, i32) {
    %c0_i32 = arith.constant 0 : i32
    %c0_i32_0 = arith.constant 0 : i32
    return %arg0, %arg1, %c0_i32 : i32, i32, i32
  }
  func.func @transform_1(%arg0: i32, %arg1: i32, %arg2: i32) -> (i32, i32, i32) {
    %c0_i32 = arith.constant 0 : i32
    %c0_i32_0 = arith.constant 0 : i32
    return %arg0, %c0_i32, %arg2 : i32, i32, i32
  }
  func.func @transform_2(%arg0: i32, %arg1: i32, %arg2: i32) -> (i32, i32, i32) {
    %c0_i32 = arith.constant 0 : i32
    return %arg0, %arg1, %arg2 : i32, i32, i32
  }
  func.func @transform_3(%arg0: i32, %arg1: i32, %arg2: i32) -> (i32, i32, i32) {
    %c0_i32 = arith.constant 0 : i32
    %c0_i32_0 = arith.constant 0 : i32
    return %arg0, %arg1, %c0_i32 : i32, i32, i32
  }
  func.func @transform_4(%arg0: i32, %arg1: i32, %arg2: i32) -> (i32, i32, i32) {
    %c0_i32 = arith.constant 0 : i32
    %c0_i32_0 = arith.constant 0 : i32
    return %arg0, %c0_i32, %arg2 : i32, i32, i32
  }
}

</mosaic_0001>

<llo_original>
// kernel: tpu_custom_call.1
$region0: #{tpu_custom_call.1}
  #allocation0 [shape = 'u32[]', space=smem, size = 0x4, offset = 0x4, fixed_abs, tag = 'smem constant byte address 0x4 - core index']
  #allocation1 [shape = 'u32[144,128]{1,0:T(1,128)}', space=vmem, size = 0x12000, scoped, tag = 'internal scratch']
  #allocation2 [shape = 'f32[16,1]{1,0:T(8,128)}', space=vmem, size = 0x2000, scoped, tag = 'scratch operand']
  #allocation3 [shape = 'f32[1,1,24]{2,1,0:T(1,128)}', space=vmem, size = 0x200, scoped, tag = 'scratch operand']
  #allocation4 [shape = 's32[1,1,24]{2,1,0:T(1,128)}', space=vmem, size = 0x200, scoped, tag = 'scratch operand']
  %s0 = inlined_call_operand.vmem [shape: bf16[2,16,32], index: 0, kind: input, shape index: {}]
  %s1 = inlined_call_operand.vmem [shape: bf16[2,32,24], index: 1, kind: input, shape index: {}]
  %s2 = inlined_call_operand.hbm [shape: f32[2,16,24], index: 2, kind: output, shape index: {0}]
  %s3 = inlined_call_operand.vmem [shape: s32[2,16,1], index: 3, kind: output, shape index: {1}]
  %s4 = inlined_call_operand.hbm [shape: s32[2,1,24], index: 4, kind: output, shape index: {2}]
  %5 = xla_tuple %s2, %s3, %s4
  %s6 = sld [smem:[#allocation0]]
  $region65: #{tpu_custom_call.1} parent=0
    _
  %s8 = ssub.s32 1, %s6
  %s9 = scalar_select 0, %s8, %s6
  $region1: #{tpu_custom_call.1} parent=0
    #allocation5 [shape = 'u8[16384]{0}', space=vmem, size = 0x4000, scoped, tag = 'output window, operand 0']
    #allocation6 [shape = 's32[2]{0}', space=sflag, size = 0x8, scoped, tag = 'scoped memory for tpu_custom_call.1']
    #allocation7 [shape = 'u8[1024]{0}', space=vmem, size = 0x400, scoped, tag = 'output window, operand 2']
    #allocation8 [shape = 's32[2]{0}', space=sflag, size = 0x8, scoped, tag = 'scoped memory for tpu_custom_call.1']
    %10 = vsyncpa [#allocation6], 0
    %s11 = scalar_lea.sflag [#allocation6], 1
    %12 = vsyncpa %s11, 0
    %13 = vsyncpa [#allocation8], 0
    %s14 = scalar_lea.sflag [#allocation8], 1
    %15 = vsyncpa %s14, 0
    loop: start=0, step=1, limit=4
    $region2: #{tpu_custom_call.1} parent=1 // loop_pre_header
      _
    $region3: #{tpu_custom_call.1} parent=1 // loop_header
      %s17 = sphi 0, %s21
      %p18 = scmp.ge.s32.totalorder %s17, 4
      %s24 = sphi 0, %s43
      %s25 = sphi 0, %s39
      %s26 = sphi 0, %s35
      %s27 = sphi 0, %s24
      %s28 = sphi 0, %s25
      %s29 = sphi 0, %s26
      %s30 = sphi 0, %s27
      %s31 = sphi 0, %s28
      %s32 = sphi 0, %s29
      %s48 = sphi 0, %s50
      %s51 = sphi 0, %s48
      %s52 = sphi 0, %s51
      %s68 = sphi 0, %s52
      %s76 = sphi 0, %s78
      %s79 = sphi 0, %s76
      %s80 = sphi 0, %s79
      %s96 = sphi 0, %s80
      %s106 = sphi 0, %s108
      %s109 = sphi 0, %s106
      %s110 = sphi 0, %s109
      %s126 = sphi 0, %s110
      %s134 = sphi 0, %s136
      %s137 = sphi 0, %s134
      %s138 = sphi 0, %s137
      %s154 = sphi 0, %s138
      %s162 = sphi 0, %s164
      %s165 = sphi 0, %s162
      %s166 = sphi 0, %s165
      %s182 = sphi 0, %s166
    $region4: #{tpu_custom_call.1} parent=1 // loop_header_branch
      %20 = sbr.rel (%p18) target = $region8
    $region5: #{tpu_custom_call.1} parent=1 // loop_body
      %s22 = ssub.s32 %s17, 1
      %s23 = ssub.s32 %s17, 2
      %s33 = sadd.s32 1, %s26
      %p34 = scmp.ge.s32.totalorder %s33, 1
      %s35 = scalar_select %p34, 0, %s33
      %s36 = sadd.s32 1, %s25
      %s37 = scalar_select %p34, %s36, %s25
      %p38 = scmp.ge.s32.totalorder %s37, 1
      %s39 = scalar_select %p38, 0, %s37
      %s40 = sadd.s32 1, %s24
      %s41 = scalar_select %p38, %s40, %s24
      %p42 = scmp.ge.s32.totalorder %s41, 2
      %s43 = scalar_select %p42, 0, %s41
      %s44 = ssub.s32 %s24, %s43
      %s45 = ssub.s32 %s25, %s39
      %s46 = sor.u32 %s44, %s45
      %p47 = scmp.eq.s32.totalorder %s46, 0
      %s49 = sadd.s32 %s48, 1
      %s50 = scalar_select %p47, %s48, %s49
      %p53 = pneg %p47
      %p54 = scmp.eq.s32.totalorder %s17, 1
      %p55 = por %p53, %p54
      %p56 = scmp.ne.s32.totalorder %s48, %s51
      %p57 = scmp.eq.s32.totalorder %s17, 0
      %p58 = por %p56, %p57
      %p59 = scmp.ne.s32.totalorder %s48, %s51
      %p60 = scmp.eq.s32.totalorder %s22, 1
      %p61 = por %p59, %p60
      %p62 = scmp.ne.s32.totalorder %s51, %s52
      %p63 = scmp.eq.s32.totalorder %s22, 0
      %p64 = por %p62, %p63
      %p65 = scmp.ne.s32.totalorder %s51, %s52
      %p66 = scmp.eq.s32.totalorder %s23, 1
      %p67 = por %p65, %p66
      %p69 = scmp.ne.s32.totalorder %s52, %s68
      %p70 = scmp.eq.s32.totalorder %s23, 0
      %p71 = por %p69, %p70
      %s72 = ssub.s32 %s24, %s43
      %s73 = ssub.s32 %s26, %s35
      %s74 = sor.u32 %s72, %s73
      %p75 = scmp.eq.s32.totalorder %s74, 0
      %s77 = sadd.s32 %s76, 1
      %s78 = scalar_select %p75, %s76, %s77
      %p81 = pneg %p75
      %p82 = scmp.eq.s32.totalorder %s17, 1
      %p83 = por %p81, %p82
      %p84 = scmp.ne.s32.totalorder %s76, %s79
      %p85 = scmp.eq.s32.totalorder %s17, 0
      %p86 = por %p84, %p85
      %p87 = scmp.ne.s32.totalorder %s76, %s79
      %p88 = scmp.eq.s32.totalorder %s22, 1
      %p89 = por %p87, %p88
      %p90 = scmp.ne.s32.totalorder %s79, %s80
      %p91 = scmp.eq.s32.totalorder %s22, 0
      %p92 = por %p90, %p91
      %p93 = scmp.ne.s32.totalorder %s79, %s80
      %p94 = scmp.eq.s32.totalorder %s23, 1
      %p95 = por %p93, %p94
      %p97 = scmp.ne.s32.totalorder %s80, %s96
      %p98 = scmp.eq.s32.totalorder %s23, 0
      %p99 = por %p97, %p98
      %s100 = ssub.s32 %s24, %s43
      %s101 = ssub.s32 %s25, %s39
      %s102 = sor.u32 %s100, %s101
      %s103 = ssub.s32 %s26, %s35
      %s104 = sor.u32 %s102, %s103
      %p105 = scmp.eq.s32.totalorder %s104, 0
      %s107 = sadd.s32 %s106, 1
      %s108 = scalar_select %p105, %s106, %s107
      %p111 = pneg %p105
      %p112 = scmp.eq.s32.totalorder %s17, 1
      %p113 = por %p111, %p112
      %p114 = scmp.ne.s32.totalorder %s106, %s109
      %p115 = scmp.eq.s32.totalorder %s17, 0
      %p116 = por %p114, %p115
      %p117 = scmp.ne.s32.totalorder %s106, %s109
      %p118 = scmp.eq.s32.totalorder %s22, 1
      %p119 = por %p117, %p118
      %p120 = scmp.ne.s32.totalorder %s109, %s110
      %p121 = scmp.eq.s32.totalorder %s22, 0
      %p122 = por %p120, %p121
      %p123 = scmp.ne.s32.totalorder %s109, %s110
      %p124 = scmp.eq.s32.totalorder %s23, 1
      %p125 = por %p123, %p124
      %p127 = scmp.ne.s32.totalorder %s110, %s126
      %p128 = scmp.eq.s32.totalorder %s23, 0
      %p129 = por %p127, %p128
      %s130 = ssub.s32 %s24, %s43
      %s131 = ssub.s32 %s25, %s39
      %s132 = sor.u32 %s130, %s131
      %p133 = scmp.eq.s32.totalorder %s132, 0
      %s135 = sadd.s32 %s134, 1
      %s136 = scalar_select %p133, %s134, %s135
      %p139 = pneg %p133
      %p140 = scmp.eq.s32.totalorder %s17, 1
      %p141 = por %p139, %p140
      %p142 = scmp.ne.s32.totalorder %s134, %s137
      %p143 = scmp.eq.s32.totalorder %s17, 0
      %p144 = por %p142, %p143
      %p145 = scmp.ne.s32.totalorder %s134, %s137
      %p146 = scmp.eq.s32.totalorder %s22, 1
      %p147 = por %p145, %p146
      %p148 = scmp.ne.s32.totalorder %s137, %s138
      %p149 = scmp.eq.s32.totalorder %s22, 0
      %p150 = por %p148, %p149
      %p151 = scmp.ne.s32.totalorder %s137, %s138
      %p152 = scmp.eq.s32.totalorder %s23, 1
      %p153 = por %p151, %p152
      %p155 = scmp.ne.s32.totalorder %s138, %s154
      %p156 = scmp.eq.s32.totalorder %s23, 0
      %p157 = por %p155, %p156
      %s158 = ssub.s32 %s24, %s43
      %s159 = ssub.s32 %s26, %s35
      %s160 = sor.u32 %s158, %s159
      %p161 = scmp.eq.s32.totalorder %s160, 0
      %s163 = sadd.s32 %s162, 1
      %s164 = scalar_select %p161, %s162, %s163
      %p167 = pneg %p161
      %p168 = scmp.eq.s32.totalorder %s17, 1
      %p169 = por %p167, %p168
      %p170 = scmp.ne.s32.totalorder %s162, %s165
      %p171 = scmp.eq.s32.totalorder %s17, 0
      %p172 = por %p170, %p171
      %p173 = scmp.ne.s32.totalorder %s162, %s165
      %p174 = scmp.eq.s32.totalorder %s22, 1
      %p175 = por %p173, %p174
      %p176 = scmp.ne.s32.totalorder %s165, %s166
      %p177 = scmp.eq.s32.totalorder %s22, 0
      %p178 = por %p176, %p177
      %p179 = scmp.ne.s32.totalorder %s165, %s166
      %p180 = scmp.eq.s32.totalorder %s23, 1
      %p181 = por %p179, %p180
      %p183 = scmp.ne.s32.totalorder %s166, %s182
      %p184 = scmp.eq.s32.totalorder %s23, 0
      %p185 = por %p183, %p184
      %p186 = scmp.le.s32.totalorder 1, %s17
      %p187 = scmp.lt.s32.totalorder %s17, 3
      %p188 = pnand %p186, %p187
      %p189 = pneg %p188
      // Predicated region
      $region9: #{tpu_custom_call.1} parent=5 // pred_check
        _
      $region10: #{tpu_custom_call.1} parent=5 // pred_check_branch
        %191 = sbr.rel (%p188) target = $region12
      $region11: #{tpu_custom_call.1} parent=5 // pred_region
        %s192 = ssub.s32 %s17, 1
      $region12: #{tpu_custom_call.1} parent=5 // pred_fallthru
        _
      %p193 = scmp.lt.s32.totalorder %s17, 2
      // Predicated region
      $region13: #{tpu_custom_call.1} parent=5 // pred_check
        %p194 = pneg %p193
      $region14: #{tpu_custom_call.1} parent=5 // pred_check_branch
        %196 = sbr.rel (%p194) target = $region16
      $region15: #{tpu_custom_call.1} parent=5 // pred_region
        // Predicated region
        $region17: #{tpu_custom_call.1} parent=15 // pred_check
          %p197 = pneg %p58
        $region18: #{tpu_custom_call.1} parent=15 // pred_check_branch
          %199 = sbr.rel (%p197) target = $region20
        $region19: #{tpu_custom_call.1} parent=15 // pred_region
          %s200 = smul.u32 2, %s25
          %p201 = scmp.lt.s32.totalorder %s24, 1
          %s202 = scalar_select %p201, %s24, 1
          %p203 = scmp.lt.s32.totalorder %s200, 1
          %s204 = scalar_select %p203, %s200, 1
          %s205 = smul.addr %s202, 2
          %s206 = sadd.s32 %s204, %s205
          %s207 = smul.addr %s206, 4
          %s208 = scalar_lea.vmem %s0, %s207
          %s209 = smul.u32 2, %s25
        $region20: #{tpu_custom_call.1} parent=15 // pred_fallthru
          _
        // Predicated region
        $region21: #{tpu_custom_call.1} parent=15 // pred_check
          %p210 = pneg %p86
        $region22: #{tpu_custom_call.1} parent=15 // pred_check_branch
          %212 = sbr.rel (%p210) target = $region24
        $region23: #{tpu_custom_call.1} parent=15 // pred_region
          %p213 = scmp.lt.s32.totalorder %s24, 1
          %s214 = scalar_select %p213, %s24, 1
          %p215 = scmp.lt.s32.totalorder %s26, 0
          %s216 = scalar_select %p215, %s26, 0
          %s217 = smul.addr %s214, 4
          %s218 = sadd.s32 %s216, %s217
          %s219 = smul.addr %s218, 4
          %s220 = scalar_lea.vmem %s1, %s219
        $region24: #{tpu_custom_call.1} parent=15 // pred_fallthru
          _
      $region16: #{tpu_custom_call.1} parent=5 // pred_fallthru
        _
      %p221 = scmp.le.s32.totalorder 1, %s17
      %p222 = scmp.lt.s32.totalorder %s17, 3
      %p223 = pnand %p221, %p222
      %p224 = pneg %p223
      // Predicated region
      $region25: #{tpu_custom_call.1} parent=5 // pred_check
        _
      $region26: #{tpu_custom_call.1} parent=5 // pred_check_branch
        %226 = sbr.rel (%p223) target = $region28
      $region27: #{tpu_custom_call.1} parent=5 // pred_region
        %s227 = ssub.s32 %s17, 1
        %s228 = smul.u32 2, %s28
        %p229 = scmp.lt.s32.totalorder %s27, 1
        %s230 = scalar_select %p229, %s27, 1
        %p231 = scmp.lt.s32.totalorder %s228, 1
        %s232 = scalar_select %p231, %s228, 1
        %s233 = smul.addr %s230, 2
        %s234 = sadd.s32 %s232, %s233
        %s235 = smul.addr %s234, 4
        %s236 = scalar_lea.vmem %s0, %s235
        %p237 = pneg %p64
        %p238 = pneg %p61
        %p239 = scmp.lt.s32.totalorder %s27, 1
        %s240 = scalar_select %p239, %s27, 1
        %p241 = scmp.lt.s32.totalorder %s29, 0
        %s242 = scalar_select %p241, %s29, 0
        %s243 = smul.addr %s240, 4
        %s244 = sadd.s32 %s242, %s243
        %s245 = smul.addr %s244, 4
        %s246 = scalar_lea.vmem %s1, %s245
        %p247 = pneg %p92
        %p248 = pneg %p89
        %p249 = pneg %p122
        %p250 = pneg %p119
        %s251 = sand.u32 %s109, 1
        %s252 = scalar_lea.sflag [#allocation6], %s251
        %s253 = sand.u32 %s109, 1
        %s254 = smul.addr %s253, 16
        %s255 = scalar_lea.vmem [#allocation5], %s254
        %p256 = pneg %p150
        %p257 = pneg %p147
        %s258 = smul.u32 2, %s28
        %p259 = scmp.lt.s32.totalorder %s27, 1
        %s260 = scalar_select %p259, %s27, 1
        %p261 = scmp.lt.s32.totalorder %s258, 1
        %s262 = scalar_select %p261, %s258, 1
        %s263 = smul.addr %s260, 2
        %s264 = sadd.s32 %s262, %s263
        %s265 = smul.addr %s264, 8
        %s266 = scalar_lea.vmem %s3, %s265
        %p267 = pneg %p178
        %p268 = pneg %p175
        %s269 = sand.u32 %s165, 1
        %s270 = scalar_lea.sflag [#allocation8], %s269
        %s271 = sand.u32 %s165, 1
        %s272 = scalar_lea.vmem [#allocation7], %s271
        %s273 = smul.u32 2, %s28
        %p274 = scmp.lt.s32.totalorder %s27, 1
        %s275 = scalar_select %p274, %s27, 1
        %p276 = scmp.lt.s32.totalorder %s273, 1
        %s277 = scalar_select %p276, %s273, 1
        %s278 = smul.addr %s275, 2
        %s279 = sadd.s32 %s277, %s278
        %s280 = smul.addr %s279, 4
        %s281 = scalar_lea.vmem %s0, %s280
        %s282 = smul.u32 2, %s28
        %p283 = scmp.lt.s32.totalorder %s27, 1
        %s284 = scalar_select %p283, %s27, 1
        %p285 = scmp.lt.s32.totalorder %s29, 0
        %s286 = scalar_select %p285, %s29, 0
        %s287 = smul.addr %s284, 4
        %s288 = sadd.s32 %s286, %s287
        %s289 = smul.addr %s288, 4
        %s290 = scalar_lea.vmem %s1, %s289
        %s291 = smul.u32 2, %s28
        %s292 = smul.u32 2, %s28
        %p293 = scmp.lt.s32.totalorder %s27, 1
        %s294 = scalar_select %p293, %s27, 1
        %p295 = scmp.lt.s32.totalorder %s292, 1
        %s296 = scalar_select %p295, %s292, 1
        %s297 = smul.addr %s294, 2
        %s298 = sadd.s32 %s296, %s297
        %s299 = smul.addr %s298, 8
        %s300 = scalar_lea.vmem %s3, %s299
        %s301 = smul.u32 2, %s28
        %v303 = vld [vmem:[%s281] sm:$0xf]
        %v304 = vld [vmem:[%s281 + $0x4] sm:$0xf]
        %v305 = vld [vmem:[%s290] sm:$0xf]
        %v306 = vld [vmem:[%s290 + $0x4] sm:$0xf]
        %v307 = vld [vmem:[%s290 + $0x8] sm:$0xf]
        %v308 = vld [vmem:[%s290 + $0xc] sm:$0xf]
        %v311 = vunpack.c.l.b16 %v303
        %v312 = vunpack.c.l.b16 %v304
        %v313 = vpack.c.b16 %v312, %v311
        %v318 = vunpack.c.l.b16 %v305
        %v319 = vunpack.c.l.b16 %v306
        %v320 = vunpack.c.l.b16 %v307
        %v321 = vunpack.c.l.b16 %v308
        %v322 = vpack.c.b16 %v319, %v318
        %v323 = vpack.c.b16 %v321, %v320
        %vm326 = vcmask 261120
        %v328 = vsel %vm326, %v313, 0
        %330 = vmatprep.subr.bf16.mxu0 0
        %331 = vmatpush1.bf16.msra.mxu0 %v322
        %332 = vmatprep.subr.bf16.mxu0 0
        %333 = vmatpush1.bf16.msra.mxu0 %v323
        %334 = vmatprep.subr.bf16.mxu0 0
        %335 = vmatpush1.bf16.msra.mxu0 0
        %336 = vmatprep.subr.bf16.mxu0 0
        %337 = vmatpush1.bf16.msra.mxu0 0
        %338 = vmatprep.subr.bf16.mxu0 0
        %339 = vmatpush1.bf16.msra.mxu0 0
        %340 = vmatprep.subr.bf16.mxu0 0
        %341 = vmatpush1.bf16.msra.mxu0 0
        %342 = vmatprep.subr.bf16.mxu0 0
        %343 = vmatpush1.bf16.msra.mxu0 0
        %344 = vmatprep.subr.bf16.mxu0 0
        %345 = vmatpush1.bf16.msra.mxu0 0
        %346 = vmatprep.subr.bf16.mxu0 0
        %347 = vmatpush1.bf16.msra.mxu0 0
        %348 = vmatprep.subr.bf16.mxu0 0
        %349 = vmatpush1.bf16.msra.mxu0 0
        %350 = vmatprep.subr.bf16.mxu0 0
        %351 = vmatpush1.bf16.msra.mxu0 0
        %352 = vmatprep.subr.bf16.mxu0 0
        %353 = vmatpush1.bf16.msra.mxu0 0
        %354 = vmatprep.subr.bf16.mxu0 0
        %355 = vmatpush1.bf16.msra.mxu0 0
        %356 = vmatprep.subr.bf16.mxu0 0
        %357 = vmatpush1.bf16.msra.mxu0 0
        %358 = vmatprep.subr.bf16.mxu0 0
        %359 = vmatpush1.bf16.msra.mxu0 0
        %360 = vmatprep.subr.bf16.mxu0 0
        %361 = vmatpush1.bf16.msra.mxu0 0
        %362 = vmatprep.mubr.bf16.mxu0 0
        %363 = vmatmul.mubr.bf16.gmra.mrb[0].mxu0 %v328
        %v364 = vpop.f32.mrb[0].mxu0
        %v365 = vadd.f32 0.0, %v364
        %v366 = vpop.f32.mrb[0].mxu0
        %v367 = vpop.f32.mrb[0].mxu0
        %v368 = vadd.f32 0.0, %v367
        %v369 = vpop.f32.mrb[0].mxu0
        %370 = vdwg.mxu0
        %vm371 = vcmask 195584
        %372 = vst.msk [vmem:[%s255] sm:$0xff] %vm371, %v365
        %373 = vst.msk [vmem:[%s255 + $0x8] sm:$0xff] %vm371, %v368
        %v374 = vlaneseq
        %v375 = vand.u32 %v374, 127
        %v376 = vlaneseq
        %v377 = vshrl.u32 %v376, 7
        %v378 = vadd.s32 %v377, 8
        %p379 = scmp.eq.s32.totalorder %s29, 0
        // Predicated region
        $region29: #{tpu_custom_call.1} parent=27 // pred_check
          %p380 = pneg %p379
        $region30: #{tpu_custom_call.1} parent=27 // pred_check_branch
          %382 = sbr.rel (%p380) target = $region32
        $region31: #{tpu_custom_call.1} parent=27 // pred_region
          %vm383 = vcmask 7168
          %384 = vst.msk [vmem:[#allocation2] sm:$0xff] %vm383, -inf
          %385 = vst.msk [vmem:[#allocation2 + $0x8] sm:$0xff] %vm383, -inf
          %386 = vst.msk [vmem:[%s300] sm:$0xff] %vm383, 0
          %387 = vst.msk [vmem:[%s300 + $0x8] sm:$0xff] %vm383, 0
        $region32: #{tpu_custom_call.1} parent=27 // pred_fallthru
          _
        %v388 = vsel %vm371, %v365, -inf
        %389 = vmax.xlane.f32.xlu0 %v388
        %v390 = vpop.xlane.xlu0 %389
        %v391 = vsel %vm371, %v368, -inf
        %392 = vmax.xlane.f32.xlu0 %v391
        %v393 = vpop.xlane.xlu0 %392
        %vm394 = vcmp.eq.f32.partialorder %v365, %v390
        %vm395 = vcmp.eq.f32.partialorder %v368, %v393
        %v396 = vsel %vm394, %v375, 1073741824
        %v397 = vsel %vm395, %v375, 1073741824
        %v398 = vsel %vm371, %v396, 2147483647
        %v399 = vand.u32 %v398, 65535
        %v400 = vshra.s32 %v398, 16
        %v401 = vcvt.s32.f32 %v399
        %v402 = vcvt.s32.f32 %v400
        %403 = vmin.xlane.f32.xlu0 %v402
        %v404 = vpop.xlane.xlu0 %403
        %vm405 = vcmp.eq.f32.partialorder %v402, %v404
        %v406 = vsel %vm405, %v401, inf
        %407 = vmin.xlane.f32.xlu0 %v406
        %v408 = vpop.xlane.xlu0 %407
        %v409 = vcvt.f32.s32 %v408
        %v410 = vcvt.f32.s32 %v404
        %v411 = vshll.u32 %v410, 16
        %v412 = vadd.s32 %v411, %v409
        %v413 = vsel %vm371, %v397, 2147483647
        %v414 = vand.u32 %v413, 65535
        %v415 = vshra.s32 %v413, 16
        %v416 = vcvt.s32.f32 %v414
        %v417 = vcvt.s32.f32 %v415
        %418 = vmin.xlane.f32.xlu0 %v417
        %v419 = vpop.xlane.xlu0 %418
        %vm420 = vcmp.eq.f32.partialorder %v417, %v419
        %v421 = vsel %vm420, %v416, inf
        %422 = vmin.xlane.f32.xlu0 %v421
        %v423 = vpop.xlane.xlu0 %422
        %v424 = vcvt.f32.s32 %v423
        %v425 = vcvt.f32.s32 %v419
        %v426 = vshll.u32 %v425, 16
        %v427 = vadd.s32 %v426, %v424
        %s428 = smul.u32 %s29, 24
        %v429 = vstv %s428
        %v430 = vadd.s32 %v412, %v429
        %v431 = vadd.s32 %v427, %v429
        %v432 = vld [vmem:[#allocation2] sm:$0xff]
        %v433 = vld [vmem:[#allocation2 + $0x8] sm:$0xff]
        %vm434 = vcmp.gt.f32.partialorder %v390, %v432
        %vm435 = vcmp.gt.f32.partialorder %v393, %v433
        %v436 = vsel %vm434, %v390, %v432
        %v437 = vsel %vm435, %v393, %v433
        %vm438 = vcmask 7168
        %439 = vst.msk [vmem:[#allocation2] sm:$0xff] %vm438, %v436
        %440 = vst.msk [vmem:[#allocation2 + $0x8] sm:$0xff] %vm438, %v437
        %v441 = vld [vmem:[%s300] sm:$0xff]
        %v442 = vld [vmem:[%s300 + $0x8] sm:$0xff]
        %v443 = vsel %vm434, %v430, %v441
        %v444 = vsel %vm435, %v431, %v442
        %445 = vst.msk [vmem:[%s300] sm:$0xff] %vm438, %v443
        %446 = vst.msk [vmem:[%s300 + $0x8] sm:$0xff] %vm438, %v444
        %p447 = scmp.eq.s32.totalorder %s28, 0
        // Predicated region
        $region33: #{tpu_custom_call.1} parent=27 // pred_check
          %p448 = pneg %p447
        $region34: #{tpu_custom_call.1} parent=27 // pred_check_branch
          %450 = sbr.rel (%p448) target = $region36
        $region35: #{tpu_custom_call.1} parent=27 // pred_region
          %s451 = scalar_lea.vmem [#allocation3], %s29
          %vm452 = vcmask 188416
          %453 = vst.msk [vmem:[%s451] sm:$0x1] %vm452, -inf
          %s454 = scalar_lea.vmem [#allocation4], %s29
          %455 = vst.msk [vmem:[%s454] sm:$0x1] %vm452, 0
        $region36: #{tpu_custom_call.1} parent=27 // pred_fallthru
          _
        %v456 = vmax.f32 %v388, %v391
        %v457 = vrot.slane %v456, 4
        %v458 = vmax.f32 %v456, %v457
        %v459 = vrot.slane %v458, 2
        %v460 = vmax.f32 %v458, %v459
        %v461 = vrot.slane %v460, 1
        %v462 = vmax.f32 %v460, %v461
        %vm463 = vcmp.eq.f32.partialorder %v365, %v462
        %vm464 = vcmp.eq.f32.partialorder %v368, %v462
        %v465 = vsel %vm463, %v377, 1073741824
        %v466 = vsel %vm464, %v378, 1073741824
        %v467 = vsel %vm371, %v465, 2147483647
        %v468 = vsel %vm371, %v466, 2147483647
        %vm469 = vcmp.lt.s32.totalorder %v467, %v468
        %v470 = vsel %vm469, %v467, %v468
        %v471 = vrot.slane %v470, 4
        %vm472 = vcmp.lt.s32.totalorder %v470, %v471
        %v473 = vsel %vm472, %v470, %v471
        %v474 = vrot.slane %v473, 2
        %vm475 = vcmp.lt.s32.totalorder %v473, %v474
        %v476 = vsel %vm475, %v473, %v474
        %v477 = vrot.slane %v476, 1
        %vm478 = vcmp.lt.s32.totalorder %v476, %v477
        %v479 = vsel %vm478, %v476, %v477
        %s480 = smul.u32 %s28, 16
        %v481 = vstv %s480
        %v482 = vadd.s32 %v479, %v481
        %s483 = scalar_lea.vmem [#allocation3], %s29
        %v484 = vld [vmem:[%s483] sm:$0x1]
        %vm485 = vcmp.gt.f32.partialorder %v462, %v484
        %v486 = vsel %vm485, %v462, %v484
        %s487 = scalar_lea.vmem [#allocation4], %s29
        %v488 = vld [vmem:[%s487] sm:$0x1]
        %v489 = vsel %vm485, %v482, %v488
        %vm490 = vcmask 188416
        %491 = vst.msk [vmem:[%s483] sm:$0x1] %vm490, %v486
        %492 = vst.msk [vmem:[%s487] sm:$0x1] %vm490, %v489
        %493 = vst.msk [vmem:[%s272] sm:$0x1] %vm490, %v489
        %s494 = sand.u32 %s109, 1
        %s495 = scalar_lea.sflag [#allocation6], %s494
        %s496 = sand.u32 %s109, 1
        %s497 = smul.addr %s496, 16
        %s498 = scalar_lea.vmem [#allocation5], %s497
        %s499 = smul.u32 2, %s28
        %p500 = scmp.lt.s32.totalorder %s27, 1
        %s501 = scalar_select %p500, %s27, 1
        %p502 = scmp.lt.s32.totalorder %s499, 1
        %s503 = scalar_select %p502, %s499, 1
        %s504 = smul.addr %s501, 2
        %s505 = sadd.s32 %s503, %s504
        %s506 = smul.addr %s505, 8
        %s507 = scalar_lea.vmem %s3, %s506
        %s508 = sand.u32 %s165, 1
        %s509 = scalar_lea.sflag [#allocation8], %s508
        %s510 = sand.u32 %s165, 1
        %s511 = scalar_lea.vmem [#allocation7], %s510
        // Predicated region
        $region37: #{tpu_custom_call.1} parent=27 // pred_check
          %p512 = pneg %p119
        $region38: #{tpu_custom_call.1} parent=27 // pred_check_branch
          %514 = sbr.rel (%p512) target = $region40
        $region39: #{tpu_custom_call.1} parent=27 // pred_region
          %s515 = smul.u32 2, %s28
          %s517 = ssub.s32 256, 256
          %518 = vsyncadd %s495, %s517
          %s519 = sadd.s32 %s29, %s515
          %s520 = smul.addr %s27, 2
          %s521 = sadd.s32 %s519, %s520
          %s522 = smul.addr %s521, 128
          %s523 = scalar_lea.hbm %s2, %s522
          %s524 = sshll.u32 %s498, 4
          %s525 = int_to_ptr.vmem [resolvable:$true] %s524
          %530 = dma.vmem_to_hbm [thread:$0]  %s525, 256, %s523, %s495, 128, 128, 8
        $region40: #{tpu_custom_call.1} parent=27 // pred_fallthru
          _
        // Predicated region
        $region41: #{tpu_custom_call.1} parent=27 // pred_check
          %p531 = pneg %p147
        $region42: #{tpu_custom_call.1} parent=27 // pred_check_branch
          %533 = sbr.rel (%p531) target = $region44
        $region43: #{tpu_custom_call.1} parent=27 // pred_region
          %s534 = smul.u32 2, %s28
        $region44: #{tpu_custom_call.1} parent=27 // pred_fallthru
          _
        // Predicated region
        $region45: #{tpu_custom_call.1} parent=27 // pred_check
          %p535 = pneg %p175
        $region46: #{tpu_custom_call.1} parent=27 // pred_check_branch
          %537 = sbr.rel (%p535) target = $region48
        $region47: #{tpu_custom_call.1} parent=27 // pred_region
          %s539 = ssub.s32 16, 16
          %540 = vsyncadd %s509, %s539
          %s541 = sadd.s32 %s29, %s27
          %s542 = smul.addr %s541, 16
          %s543 = scalar_lea.hbm %s4, %s542
          %s545 = sshll.u32 %s511, 4
          %s546 = int_to_ptr.vmem [resolvable:$true] %s545
          %548 = dma.vmem_to_hbm [thread:$0]  %s546, 16, %s543, %s509
        $region48: #{tpu_custom_call.1} parent=27 // pred_fallthru
          _
      $region28: #{tpu_custom_call.1} parent=5 // pred_fallthru
        _
      %p549 = scmp.le.s32.totalorder 2, %s17
      // Predicated region
      $region49: #{tpu_custom_call.1} parent=5 // pred_check
        %p550 = pneg %p549
      $region50: #{tpu_custom_call.1} parent=5 // pred_check_branch
        %552 = sbr.rel (%p550) target = $region52
      $region51: #{tpu_custom_call.1} parent=5 // pred_region
        %s553 = ssub.s32 %s17, 2
        // Predicated region
        $region53: #{tpu_custom_call.1} parent=51 // pred_check
          %p554 = pneg %p125
        $region54: #{tpu_custom_call.1} parent=51 // pred_check_branch
          %556 = sbr.rel (%p554) target = $region56
        $region55: #{tpu_custom_call.1} parent=51 // pred_region
          %s557 = sand.u32 %s110, 1
          %s558 = scalar_lea.sflag [#allocation6], %s557
          %s559 = sand.u32 %s110, 1
          %s560 = smul.addr %s559, 16
          %s561 = scalar_lea.vmem [#allocation5], %s560
          %562 = dma.done %s558, 256
        $region56: #{tpu_custom_call.1} parent=51 // pred_fallthru
          _
        // Predicated region
        $region57: #{tpu_custom_call.1} parent=51 // pred_check
          %p563 = pneg %p153
        $region58: #{tpu_custom_call.1} parent=51 // pred_check_branch
          %565 = sbr.rel (%p563) target = $region60
        $region59: #{tpu_custom_call.1} parent=51 // pred_region
          %s566 = smul.u32 2, %s31
          %p567 = scmp.lt.s32.totalorder %s30, 1
          %s568 = scalar_select %p567, %s30, 1
          %p569 = scmp.lt.s32.totalorder %s566, 1
          %s570 = scalar_select %p569, %s566, 1
          %s571 = smul.addr %s568, 2
          %s572 = sadd.s32 %s570, %s571
          %s573 = smul.addr %s572, 8
          %s574 = scalar_lea.vmem %s3, %s573
        $region60: #{tpu_custom_call.1} parent=51 // pred_fallthru
          _
        // Predicated region
        $region61: #{tpu_custom_call.1} parent=51 // pred_check
          %p575 = pneg %p181
        $region62: #{tpu_custom_call.1} parent=51 // pred_check_branch
          %577 = sbr.rel (%p575) target = $region64
        $region63: #{tpu_custom_call.1} parent=51 // pred_region
          %s578 = sand.u32 %s166, 1
          %s579 = scalar_lea.sflag [#allocation8], %s578
          %s580 = sand.u32 %s166, 1
          %s581 = scalar_lea.vmem [#allocation7], %s580
          %582 = dma.done %s579, 16
        $region64: #{tpu_custom_call.1} parent=51 // pred_fallthru
          _
      $region52: #{tpu_custom_call.1} parent=5 // pred_fallthru
        _
    $region6: #{tpu_custom_call.1} parent=1 // loop_footer
      %s21 = sadd.s32 1, %s17
    $region7: #{tpu_custom_call.1} parent=1 // loop_footer_branch
      %16 = sbr.rel target = $region3
    $region8: #{tpu_custom_call.1} parent=1 // loop_exit
      _
    %583 = vsyncpa [#allocation6], 1
    %s584 = scalar_lea.sflag [#allocation6], 1
    %585 = vsyncpa %s584, 1
    %586 = vsyncpa [#allocation8], 1
    %s587 = scalar_lea.sflag [#allocation8], 1
    %588 = vsyncpa %s587, 1

</llo_original>
